<compile_context>
chip_gen: v7x
topology: tpu7x:2x2x1
jax: 0.10.0
libtpu: 0.0.40
codegen_flags: <defaults>
</compile_context>

<pallas_src>
import jax
import jax.numpy as jnp
from jax import lax
from jax.experimental import pallas as pl
from jax.experimental.pallas import tpu as pltpu


def _patch_embed_kernel(x_ref, w_ref, b_ref, o_ref):
    # One M-tile: (TM, K) @ (K, E_pad) on the MXU, f32 accumulate, + f32 bias.
    acc = jnp.dot(x_ref[...], w_ref[...], preferred_element_type=jnp.float32)
    o_ref[...] = (acc + b_ref[...]).astype(o_ref.dtype)


def _round_up(v, m):
    return ((v + m - 1) // m) * m


def _round_down(v, m):
    return (v // m) * m


def _vmem_budget_bytes():
    """Generation-aware VMEM budget (bytes) available to this kernel."""
    try:
        cap = int(pltpu.get_tpu_info().vmem_capacity_bytes)
    except Exception:  # query unavailable: conservative (v7x-sized) fallback
        cap = 64 * 1024 * 1024
    # ~75% of physical, capped at 96 MiB: ~96 MiB on v5e/v6e (128 MiB VMEM),
    # ~48 MiB on v7x (64 MiB VMEM).  Leaves headroom for Mosaic internals.
    return min((cap * 3) // 4, 96 * 1024 * 1024)


def _derive_tile_m(M, K, E_pad, in_itemsize, out_itemsize, budget):
    """Pick an M-tile that fits `budget` bytes of VMEM and feeds the pipeline."""
    # Grid-invariant weight + bias, counted double-buffered (conservative).
    # TODO(synk): pipeline_mode=pl.Buffered(1) on these frees ~K*E_pad bytes.
    resident = 2 * (K * E_pad * in_itemsize + E_pad * 4)
    # Per-row: double-buffered x tile + double-buffered out tile + the f32
    # dot-result intermediate (before the out-dtype cast).
    per_row = 2 * K * in_itemsize + 2 * E_pad * out_itemsize + E_pad * 4
    avail = max(budget - resident, per_row * 16)
    cap = avail // per_row
    # 1-2K rows per step already sits at ~86% of HBM roofline; bigger tiles
    # only add latency.
    cap = min(cap, 2048)
    # Keep >= 2 grid steps so the "parallel" M axis feeds both v7x TensorCores.
    cap = min(cap, max(16, _round_up(pl.cdiv(M, 2), 16)))
    cap = max(cap, 8)
    # MXU-friendly alignment: 256 (v6e/v7x MXU width) when affordable,
    # else 16 (bf16 sublane packing; also fine for f32).
    if cap >= 256:
        align = 256
    elif cap >= 16:
        align = 16
    else:
        align = 8
    tile = max(align, _round_down(cap, align))
    # Prefer a tile that divides M exactly: no padded rows, and the trailing
    # out[:M] slice (an extra read+write of the whole output) is avoided.
    t = tile
    for _ in range(8):
        if t < align or M % t == 0:
            break
        t -= align
    if t >= align and M % t == 0:
        tile = t
    return int(tile)


def patch_embedding(x, weight, bias, patch_size, *, tile_m=None,
                    compute_dtype=None, out_dtype=None):
    """x: (B, C, H, W) NCHW; weight: (E, C, P, P) torch conv layout; bias: (E,).

    Returns (B, n_patches, E), matching Conv2d(stride=P).flatten(2).transpose(1,2).
    """
    B, C, H, W = x.shape
    E = weight.shape[0]
    P = patch_size
    Hp, Wp = H // P, W // P
    n_patches = Hp * Wp
    M = B * n_patches
    K = C * P * P

    if compute_dtype is None:
        compute_dtype = x.dtype
    if out_dtype is None:
        out_dtype = x.dtype

    # --- glue: NCHW -> patch matrix (M, K) with feature order (c, i, j).
    # Cast FIRST so any materialized relayout copy is in the narrow dtype.
    xp = x.astype(compute_dtype).reshape(B, C, Hp, P, Wp, P)
    xp = jnp.transpose(xp, (0, 2, 4, 1, 3, 5)).reshape(M, K)

    # torch conv weight (E, C, P, P) -> (K, E), K ordered (c, i, j); tiny op.
    w = weight.reshape(E, K).T.astype(compute_dtype)
    b = bias.reshape(1, E).astype(jnp.float32)   # bias added in f32 post-acc

    # Lane-dense output: pad E to a multiple of 128 (unmasked vst).
    E_pad = _round_up(E, 128)
    if E_pad != E:
        w = jnp.pad(w, ((0, 0), (0, E_pad - E)))
        b = jnp.pad(b, ((0, 0), (0, E_pad - E)))

    in_itemsize = jnp.dtype(compute_dtype).itemsize
    out_itemsize = jnp.dtype(out_dtype).itemsize
    vmem_budget = _vmem_budget_bytes()

    if tile_m is None:
        # Tile against ~85% of the budget; the rest is compiler headroom.
        tile_m = _derive_tile_m(M, K, E_pad, in_itemsize, out_itemsize,
                                (vmem_budget * 85) // 100)
    tile_m = max(8, (min(int(tile_m), _round_up(M, 8)) // 8) * 8)

    # Pad M to a multiple of tile_m (padded rows receive bias only and are
    # sliced off; the auto-derived tile_m avoids this whenever it can).
    M_pad = _round_up(M, tile_m)
    if M_pad != M:
        xp = jnp.pad(xp, ((0, M_pad - M), (0, 0)))
    num_m = M_pad // tile_m

    grid_spec = pl.GridSpec(
        grid=(num_m,),
        in_specs=[
            # Streamed activations (double-buffered by the Pallas pipeline).
            pl.BlockSpec((tile_m, K), lambda i: (i, 0)),
            # Grid-invariant weight / bias: fetched once, stay VMEM-resident.
            pl.BlockSpec((K, E_pad), lambda i: (0, 0)),
            pl.BlockSpec((1, E_pad), lambda i: (0, 0)),
        ],
        out_specs=pl.BlockSpec((tile_m, E_pad), lambda i: (i, 0)),
    )

    cost = pl.CostEstimate(
        flops=2 * M_pad * K * E_pad,
        transcendentals=0,
        bytes_accessed=(M_pad * K + K * E_pad) * in_itemsize
                       + E_pad * 4 + M_pad * E_pad * out_itemsize,
    )

    out = pl.pallas_call(
        _patch_embed_kernel,
        out_shape=jax.ShapeDtypeStruct((M_pad, E_pad), out_dtype),
        grid_spec=grid_spec,
        compiler_params=pltpu.CompilerParams(
            dimension_semantics=("parallel",),          # megacore on v7x
            allow_input_fusion=[True, False, False],    # fold patchify into DMA
            vmem_limit_bytes=int(vmem_budget),
        ),
        cost_estimate=cost,
    )(xp, w, b)

    if M_pad == M and E_pad == E:
        return out.reshape(B, n_patches, E)      # free reshape, no slice copy
    return out[:M, :E].reshape(B, n_patches, E)


def _reference(x, weight, bias, patch_size):
    # Pure-JAX reference using a real strided conv (matches nn.Conv2d).
    y = lax.conv_general_dilated(
        x, weight,
        window_strides=(patch_size, patch_size),
        padding="VALID",
        dimension_numbers=("NCHW", "OIHW", "NCHW"),
    ) + bias.reshape(1, -1, 1, 1)
    B, E, Hp, Wp = y.shape
    return jnp.transpose(y.reshape(B, E, Hp * Wp), (0, 2, 1))


if __name__ == "__main__":
    # Module defaults: img_size=32, patch_size=4, in_channels=3, embed_dim=128.
    B, C, IMG, P, E = 2, 3, 32, 4, 128

    key = jax.random.PRNGKey(0)
    kx, kw, kb = jax.random.split(key, 3)
    x = jax.random.normal(kx, (B, C, IMG, IMG), dtype=jnp.float32)
    # Deterministic "init" of Conv2d(C, E, kernel=P, stride=P) parameters.
    weight = jax.random.normal(kw, (E, C, P, P), dtype=jnp.float32) * 0.02
    bias = jax.random.normal(kb, (E,), dtype=jnp.float32) * 0.02

    n_patches = (IMG // P) ** 2
    ref = jax.block_until_ready(_reference(x, weight, bias, P))

    # f32, auto-derived tile_m (grid has >= 2 steps: exercises the pipeline
    # and megacore sharding; tile divides M so no padding/slice is needed).
    out = jax.block_until_ready(patch_embedding(x, weight, bias, P))
    assert out.shape == (B, n_patches, E), out.shape
    assert jnp.allclose(out, ref, atol=1e-2, rtol=1e-2)

    # Explicit tile_m that does NOT divide M: exercises the M-padding path.
    out_pad = jax.block_until_ready(
        patch_embedding(x, weight, bias, P, tile_m=48))
    assert out_pad.shape == (B, n_patches, E), out_pad.shape
    assert jnp.allclose(out_pad, ref, atol=1e-2, rtol=1e-2)

    # bf16 compute + bf16 output (recommended MXU / HBM-traffic mode).
    out_bf16 = jax.block_until_ready(
        patch_embedding(x, weight, bias, P,
                        compute_dtype=jnp.bfloat16, out_dtype=jnp.bfloat16))
    assert out_bf16.shape == (B, n_patches, E), out_bf16.shape
    assert jnp.allclose(out_bf16.astype(jnp.float32), ref, atol=3e-2, rtol=3e-2)

    print("KERNEL_OK")
</pallas_src>

<mosaic_0001>
module attributes {stable_mosaic.version = 11 : i64} {
  func.func @_patch_embed_kernel(%arg0: i32, %arg1: memref<64x48xf32, #tpu.memory_space<vmem>>, %arg2: memref<48x128xf32, #tpu.memory_space<vmem>>, %arg3: memref<1x128xf32, #tpu.memory_space<vmem>>, %arg4: memref<64x128xf32, #tpu.memory_space<vmem>>) attributes {dimension_semantics = [#tpu.dimension_semantics<parallel>], iteration_bounds = array<i64: 2>, scalar_prefetch = 0 : i64, scratch_operands = 0 : i64, tpu.core_type = #tpu.core_type<tc>, window_params = [{transform_indices = @transform_0, window_bounds = array<i64: 64, 48>}, {pipeline_mode = #tpu.pipeline_mode<synchronous>, transform_indices = @transform_1, window_bounds = array<i64: 48, 128>}, {pipeline_mode = #tpu.pipeline_mode<synchronous>, transform_indices = @transform_2, window_bounds = array<i64: 1, 128>}, {transform_indices = @transform_3, window_bounds = array<i64: 64, 128>}]} {
    %c0 = arith.constant 0 : index
    %c0_0 = arith.constant 0 : index
    %0 = vector.load %arg1[%c0, %c0_0] : memref<64x48xf32, #tpu.memory_space<vmem>>, vector<64x48xf32>
    %c0_1 = arith.constant 0 : index
    %c0_2 = arith.constant 0 : index
    %1 = vector.load %arg2[%c0_1, %c0_2] : memref<48x128xf32, #tpu.memory_space<vmem>>, vector<48x128xf32>
    %cst = arith.constant dense<0.000000e+00> : vector<64x128xf32>
    %2 = tpu.matmul %0, %1, %cst {dimension_numbers = #tpu.dot_dimension_numbers<[1], [0], [0], [1], [0, 0, 1, 1], [], []>} : vector<64x48xf32>, vector<48x128xf32>, vector<64x128xf32> -> vector<64x128xf32>
    %c0_3 = arith.constant 0 : index
    %c0_4 = arith.constant 0 : index
    %3 = vector.load %arg3[%c0_3, %c0_4] : memref<1x128xf32, #tpu.memory_space<vmem>>, vector<1x128xf32>
    %4 = vector.broadcast %3 : vector<1x128xf32> to vector<64x128xf32>
    %5 = arith.addf %2, %4 : vector<64x128xf32>
    %c0_5 = arith.constant 0 : index
    %c0_6 = arith.constant 0 : index
    %6 = vector.load %arg4[%c0_5, %c0_6] : memref<64x128xf32, #tpu.memory_space<vmem>>, vector<64x128xf32>
    tpu.vector_store %arg4[%c0_5, %c0_6], %5 {strides = array<i32>} : memref<64x128xf32, #tpu.memory_space<vmem>>, vector<64x128xf32>,
    return
  }
  func.func @transform_0(%arg0: i32) -> (i32, i32) {
    %c0_i32 = arith.constant 0 : i32
    %c0_i32_0 = arith.constant 0 : i32
    return %arg0, %c0_i32 : i32, i32
  }
  func.func @transform_1(%arg0: i32) -> (i32, i32) {
    %c0_i32 = arith.constant 0 : i32
    %c0_i32_0 = arith.constant 0 : i32
    %c0_i32_1 = arith.constant 0 : i32
    return %c0_i32, %c0_i32_0 : i32, i32
  }
  func.func @transform_2(%arg0: i32) -> (i32, i32) {
    %c0_i32 = arith.constant 0 : i32
    %c0_i32_0 = arith.constant 0 : i32
    %c0_i32_1 = arith.constant 0 : i32
    return %c0_i32, %c0_i32_0 : i32, i32
  }
  func.func @transform_3(%arg0: i32) -> (i32, i32) {
    %c0_i32 = arith.constant 0 : i32
    %c0_i32_0 = arith.constant 0 : i32
    return %arg0, %c0_i32 : i32, i32
  }
}

</mosaic_0001>

<llo_original>
// kernel: tpu_custom_call.1
$region0: #{tpu_custom_call.1}
  #allocation0 [shape = 'u32[]', space=smem, size = 0x4, offset = 0x4, fixed_abs, tag = 'smem constant byte address 0x4 - core index']
  #allocation1 [shape = 'u32[144,128]{1,0:T(1,128)}', space=vmem, size = 0x12000, scoped, tag = 'internal scratch']
  %s0 = inlined_call_operand.vmem [shape: f32[128,48], index: 0, kind: input, shape index: {}]
  %s1 = inlined_call_operand.vmem [shape: f32[48,128], index: 1, kind: input, shape index: {}]
  %s2 = inlined_call_operand.vmem [shape: f32[1,128], index: 2, kind: input, shape index: {}]
  %s3 = inlined_call_operand.hbm [shape: f32[128,128], index: 3, kind: output, shape index: {}]
  %s4 = sld [smem:[#allocation0]]
  $region45: #{tpu_custom_call.1} parent=0
    _
  %s6 = ssub.s32 1, %s4
  %s7 = scalar_select 0, %s6, %s4
  $region1: #{tpu_custom_call.1} parent=0
    #allocation2 [shape = 'u8[65536]{0}', space=vmem, size = 0x10000, scoped, tag = 'output window, operand 0']
    #allocation3 [shape = 's32[2]{0}', space=sflag, size = 0x8, scoped, tag = 'scoped memory for tpu_custom_call.1']
    %8 = vsyncpa [#allocation3], 0
    %s9 = scalar_lea.sflag [#allocation3], 1
    %10 = vsyncpa %s9, 0
    loop: start=0, step=1, limit=4
    $region2: #{tpu_custom_call.1} parent=1 // loop_pre_header
      _
    $region3: #{tpu_custom_call.1} parent=1 // loop_header
      %s12 = sphi 0, %s16
      %p13 = scmp.ge.s32.totalorder %s12, 4
      %s22 = sphi 0, %s24
      %s25 = sphi 0, %s22
      %s26 = sphi 0, %s25
      %s42 = sphi 0, %s26
      %s46 = sphi 0, %s46
      %s48 = sphi 0, %s46
      %s49 = sphi 0, %s48
      %s63 = sphi 0, %s49
      %s67 = sphi 0, %s67
      %s69 = sphi 0, %s67
      %s70 = sphi 0, %s69
      %s84 = sphi 0, %s70
      %s90 = sphi 0, %s92
      %s93 = sphi 0, %s90
      %s94 = sphi 0, %s93
      %s110 = sphi 0, %s94
    $region4: #{tpu_custom_call.1} parent=1 // loop_header_branch
      %15 = sbr.rel (%p13) target = $region8
    $region5: #{tpu_custom_call.1} parent=1 // loop_body
      %s17 = ssub.s32 %s12, 1
      %s18 = ssub.s32 %s12, 2
      %s19 = sadd.s32 %s12, 1
      %s20 = ssub.s32 %s12, %s19
      %p21 = scmp.eq.s32.totalorder %s20, 0
      %s23 = sadd.s32 %s22, 1
      %s24 = scalar_select %p21, %s22, %s23
      %p27 = pneg %p21
      %p28 = scmp.eq.s32.totalorder %s12, 1
      %p29 = por %p27, %p28
      %p30 = scmp.ne.s32.totalorder %s22, %s25
      %p31 = scmp.eq.s32.totalorder %s12, 0
      %p32 = por %p30, %p31
      %p33 = scmp.ne.s32.totalorder %s22, %s25
      %p34 = scmp.eq.s32.totalorder %s17, 1
      %p35 = por %p33, %p34
      %p36 = scmp.ne.s32.totalorder %s25, %s26
      %p37 = scmp.eq.s32.totalorder %s17, 0
      %p38 = por %p36, %p37
      %p39 = scmp.ne.s32.totalorder %s25, %s26
      %p40 = scmp.eq.s32.totalorder %s18, 1
      %p41 = por %p39, %p40
      %p43 = scmp.ne.s32.totalorder %s26, %s42
      %p44 = scmp.eq.s32.totalorder %s18, 0
      %p45 = por %p43, %p44
      %s47 = sadd.s32 %s46, 1
      %p50 = scmp.eq.s32.totalorder %s12, 1
      %p51 = scmp.ne.s32.totalorder %s46, %s48
      %p52 = scmp.eq.s32.totalorder %s12, 0
      %p53 = por %p51, %p52
      %p54 = scmp.ne.s32.totalorder %s46, %s48
      %p55 = scmp.eq.s32.totalorder %s17, 1
      %p56 = por %p54, %p55
      %p57 = scmp.ne.s32.totalorder %s48, %s49
      %p58 = scmp.eq.s32.totalorder %s17, 0
      %p59 = por %p57, %p58
      %p60 = scmp.ne.s32.totalorder %s48, %s49
      %p61 = scmp.eq.s32.totalorder %s18, 1
      %p62 = por %p60, %p61
      %p64 = scmp.ne.s32.totalorder %s49, %s63
      %p65 = scmp.eq.s32.totalorder %s18, 0
      %p66 = por %p64, %p65
      %s68 = sadd.s32 %s67, 1
      %p71 = scmp.eq.s32.totalorder %s12, 1
      %p72 = scmp.ne.s32.totalorder %s67, %s69
      %p73 = scmp.eq.s32.totalorder %s12, 0
      %p74 = por %p72, %p73
      %p75 = scmp.ne.s32.totalorder %s67, %s69
      %p76 = scmp.eq.s32.totalorder %s17, 1
      %p77 = por %p75, %p76
      %p78 = scmp.ne.s32.totalorder %s69, %s70
      %p79 = scmp.eq.s32.totalorder %s17, 0
      %p80 = por %p78, %p79
      %p81 = scmp.ne.s32.totalorder %s69, %s70
      %p82 = scmp.eq.s32.totalorder %s18, 1
      %p83 = por %p81, %p82
      %p85 = scmp.ne.s32.totalorder %s70, %s84
      %p86 = scmp.eq.s32.totalorder %s18, 0
      %p87 = por %p85, %p86
      %s88 = ssub.s32 %s12, %s19
      %p89 = scmp.eq.s32.totalorder %s88, 0
      %s91 = sadd.s32 %s90, 1
      %s92 = scalar_select %p89, %s90, %s91
      %p95 = pneg %p89
      %p96 = scmp.eq.s32.totalorder %s12, 1
      %p97 = por %p95, %p96
      %p98 = scmp.ne.s32.totalorder %s90, %s93
      %p99 = scmp.eq.s32.totalorder %s12, 0
      %p100 = por %p98, %p99
      %p101 = scmp.ne.s32.totalorder %s90, %s93
      %p102 = scmp.eq.s32.totalorder %s17, 1
      %p103 = por %p101, %p102
      %p104 = scmp.ne.s32.totalorder %s93, %s94
      %p105 = scmp.eq.s32.totalorder %s17, 0
      %p106 = por %p104, %p105
      %p107 = scmp.ne.s32.totalorder %s93, %s94
      %p108 = scmp.eq.s32.totalorder %s18, 1
      %p109 = por %p107, %p108
      %p111 = scmp.ne.s32.totalorder %s94, %s110
      %p112 = scmp.eq.s32.totalorder %s18, 0
      %p113 = por %p111, %p112
      %p114 = scmp.le.s32.totalorder 1, %s12
      %p115 = scmp.lt.s32.totalorder %s12, 3
      %p116 = pnand %p114, %p115
      %p117 = pneg %p116
      // Predicated region
      $region9: #{tpu_custom_call.1} parent=5 // pred_check
        _
      $region10: #{tpu_custom_call.1} parent=5 // pred_check_branch
        %119 = sbr.rel (%p116) target = $region12
      $region11: #{tpu_custom_call.1} parent=5 // pred_region
        %s120 = ssub.s32 %s12, 1
        // Predicated region
        $region13: #{tpu_custom_call.1} parent=11 // pred_check
          %p121 = pneg %p59
        $region14: #{tpu_custom_call.1} parent=11 // pred_check_branch
          %123 = sbr.rel (%p121) target = $region16
        $region15: #{tpu_custom_call.1} parent=11 // pred_region
          _
        $region16: #{tpu_custom_call.1} parent=11 // pred_fallthru
          _
        // Predicated region
        $region17: #{tpu_custom_call.1} parent=11 // pred_check
          %p124 = pneg %p80
        $region18: #{tpu_custom_call.1} parent=11 // pred_check_branch
          %126 = sbr.rel (%p124) target = $region20
        $region19: #{tpu_custom_call.1} parent=11 // pred_region
          _
        $region20: #{tpu_custom_call.1} parent=11 // pred_fallthru
          _
      $region12: #{tpu_custom_call.1} parent=5 // pred_fallthru
        _
      %p127 = scmp.lt.s32.totalorder %s12, 2
      // Predicated region
      $region21: #{tpu_custom_call.1} parent=5 // pred_check
        %p128 = pneg %p127
      $region22: #{tpu_custom_call.1} parent=5 // pred_check_branch
        %130 = sbr.rel (%p128) target = $region24
      $region23: #{tpu_custom_call.1} parent=5 // pred_region
        // Predicated region
        $region25: #{tpu_custom_call.1} parent=23 // pred_check
          %p131 = pneg %p32
        $region26: #{tpu_custom_call.1} parent=23 // pred_check_branch
          %133 = sbr.rel (%p131) target = $region28
        $region27: #{tpu_custom_call.1} parent=23 // pred_region
          %s134 = smul.u32 8, %s12
          %p135 = scmp.lt.s32.totalorder %s134, 15
          %s136 = scalar_select %p135, %s134, 15
          %s137 = smul.addr %s136, 8
          %s138 = scalar_lea.vmem %s0, %s137
          %s139 = smul.u32 8, %s12
        $region28: #{tpu_custom_call.1} parent=23 // pred_fallthru
          _
      $region24: #{tpu_custom_call.1} parent=5 // pred_fallthru
        _
      %p140 = scmp.le.s32.totalorder 1, %s12
      %p141 = scmp.lt.s32.totalorder %s12, 3
      %p142 = pnand %p140, %p141
      %p143 = pneg %p142
      // Predicated region
      $region29: #{tpu_custom_call.1} parent=5 // pred_check
        _
      $region30: #{tpu_custom_call.1} parent=5 // pred_check_branch
        %145 = sbr.rel (%p142) target = $region32
      $region31: #{tpu_custom_call.1} parent=5 // pred_region
        %s146 = ssub.s32 %s12, 1
        %s147 = smul.u32 8, %s17
        %p148 = scmp.lt.s32.totalorder %s147, 15
        %s149 = scalar_select %p148, %s147, 15
        %s150 = smul.addr %s149, 8
        %s151 = scalar_lea.vmem %s0, %s150
        %p152 = pneg %p38
        %p153 = pneg %p35
        %p154 = pneg %p59
        %p155 = pneg %p56
        %p156 = pneg %p80
        %p157 = pneg %p77
        %p158 = pneg %p106
        %p159 = pneg %p103
        %s160 = sand.u32 %s93, 1
        %s161 = scalar_lea.sflag [#allocation3], %s160
        %s162 = sand.u32 %s93, 1
        %s163 = smul.addr %s162, 64
        %s164 = scalar_lea.vmem [#allocation2], %s163
        %s165 = smul.u32 8, %s17
        %p166 = scmp.lt.s32.totalorder %s165, 15
        %s167 = scalar_select %p166, %s165, 15
        %s168 = smul.addr %s167, 8
        %s169 = scalar_lea.vmem %s0, %s168
        %s170 = smul.u32 8, %s17
        %s171 = smul.u32 8, %s17
        %v172 = vld [vmem:[%s169] sm:$0xff]
        %v173 = vld [vmem:[%s169 + $0x8] sm:$0xff]
        %v174 = vld [vmem:[%s169 + $0x10] sm:$0xff]
        %v175 = vld [vmem:[%s169 + $0x18] sm:$0xff]
        %v176 = vld [vmem:[%s169 + $0x20] sm:$0xff]
        %v177 = vld [vmem:[%s169 + $0x28] sm:$0xff]
        %v178 = vld [vmem:[%s169 + $0x30] sm:$0xff]
        %v179 = vld [vmem:[%s169 + $0x38] sm:$0xff]
        %v180 = vld [vmem:[%s1] sm:$0xff]
        %v181 = vld [vmem:[%s1 + $0x8] sm:$0xff]
        %v182 = vld [vmem:[%s1 + $0x10] sm:$0xff]
        %v183 = vld [vmem:[%s1 + $0x18] sm:$0xff]
        %v184 = vld [vmem:[%s1 + $0x20] sm:$0xff]
        %v185 = vld [vmem:[%s1 + $0x28] sm:$0xff]
        %v186 = vld [vmem:[%s2] sm:$0x1]
        %v188 = vlaneseq
        %v189 = vshrl.u32 %v188, 7
        %v190 = vsub.s32 0, %v189
        %v191 = vrot.slane %v186, %v190
        %vm193 = vcmask 392192
        %v195 = vsel %vm193, %v172, 0
        %v198 = vsel %vm193, %v173, 0
        %v201 = vsel %vm193, %v174, 0
        %v204 = vsel %vm193, %v175, 0
        %v207 = vsel %vm193, %v176, 0
        %v210 = vsel %vm193, %v177, 0
        %v213 = vsel %vm193, %v178, 0
        %v216 = vsel %vm193, %v179, 0
        %218 = vmatprep.subr.mxu0 0.0
        %219 = vmatpush1.msra.mxu0 %v180
        %220 = vmatprep.subr.mxu0 0.0
        %221 = vmatpush1.msra.mxu0 %v181
        %222 = vmatprep.subr.mxu0 0.0
        %223 = vmatpush1.msra.mxu0 %v182
        %224 = vmatprep.subr.mxu0 0.0
        %225 = vmatpush1.msra.mxu0 %v183
        %226 = vmatprep.subr.mxu0 0.0
        %227 = vmatpush1.msra.mxu0 %v184
        %228 = vmatprep.subr.mxu0 0.0
        %229 = vmatpush1.msra.mxu0 %v185
        %230 = vmatprep.subr.mxu0 0.0
        %231 = vmatpush1.msra.mxu0 0.0
        %232 = vmatprep.subr.mxu0 0.0
        %233 = vmatpush1.msra.mxu0 0.0
        %234 = vmatprep.subr.mxu0 0.0
        %235 = vmatpush1.msra.mxu0 0.0
        %236 = vmatprep.subr.mxu0 0.0
        %237 = vmatpush1.msra.mxu0 0.0
        %238 = vmatprep.subr.mxu0 0.0
        %239 = vmatpush1.msra.mxu0 0.0
        %240 = vmatprep.subr.mxu0 0.0
        %241 = vmatpush1.msra.mxu0 0.0
        %242 = vmatprep.subr.mxu0 0.0
        %243 = vmatpush1.msra.mxu0 0.0
        %244 = vmatprep.subr.mxu0 0.0
        %245 = vmatpush1.msra.mxu0 0.0
        %246 = vmatprep.subr.mxu0 0.0
        %247 = vmatpush1.msra.mxu0 0.0
        %248 = vmatprep.subr.mxu0 0.0
        %249 = vmatpush1.msra.mxu0 0.0
        %250 = vmatprep.subr.mxu0 0.0
        %251 = vmatpush1.msra.mxu0 0.0
        %252 = vmatprep.subr.mxu0 0.0
        %253 = vmatpush1.msra.mxu0 0.0
        %254 = vmatprep.subr.mxu0 0.0
        %255 = vmatpush1.msra.mxu0 0.0
        %256 = vmatprep.subr.mxu0 0.0
        %257 = vmatpush1.msra.mxu0 0.0
        %258 = vmatprep.subr.mxu0 0.0
        %259 = vmatpush1.msra.mxu0 0.0
        %260 = vmatprep.subr.mxu0 0.0
        %261 = vmatpush1.msra.mxu0 0.0
        %262 = vmatprep.subr.mxu0 0.0
        %263 = vmatpush1.msra.mxu0 0.0
        %264 = vmatprep.subr.mxu0 0.0
        %265 = vmatpush1.msra.mxu0 0.0
        %266 = vmatprep.subr.mxu0 0.0
        %267 = vmatpush1.msra.mxu0 0.0
        %268 = vmatprep.subr.mxu0 0.0
        %269 = vmatpush1.msra.mxu0 0.0
        %270 = vmatprep.subr.mxu0 0.0
        %271 = vmatpush1.msra.mxu0 0.0
        %272 = vmatprep.subr.mxu0 0.0
        %273 = vmatpush1.msra.mxu0 0.0
        %274 = vmatprep.subr.mxu0 0.0
        %275 = vmatpush1.msra.mxu0 0.0
        %276 = vmatprep.subr.mxu0 0.0
        %277 = vmatpush1.msra.mxu0 0.0
        %278 = vmatprep.subr.mxu0 0.0
        %279 = vmatpush1.msra.mxu0 0.0
        %280 = vmatprep.subr.mxu0 0.0
        %281 = vmatpush1.msra.mxu0 0.0
        %282 = vmatprep.mubr.f32.mxu0 0.0
        %283 = vmatmul.mubr.f32.gmra.mrb[0].mxu0 %v195
        %v284 = vpop.f32.mrb[0].mxu0
        %v285 = vadd.f32 %v191, %v284
        %v286 = vpop.f32.mrb[0].mxu0
        %287 = vmatprep.mubr.f32.mxu0 0.0
        %288 = vmatmul.mubr.f32.gmra.mrb[0].mxu0 %v198
        %v289 = vpop.f32.mrb[0].mxu0
        %v290 = vadd.f32 %v191, %v289
        %v291 = vpop.f32.mrb[0].mxu0
        %292 = vmatprep.mubr.f32.mxu0 0.0
        %293 = vmatmul.mubr.f32.gmra.mrb[0].mxu0 %v201
        %v294 = vpop.f32.mrb[0].mxu0
        %v295 = vadd.f32 %v191, %v294
        %v296 = vpop.f32.mrb[0].mxu0
        %297 = vmatprep.mubr.f32.mxu0 0.0
        %298 = vmatmul.mubr.f32.gmra.mrb[0].mxu0 %v204
        %v299 = vpop.f32.mrb[0].mxu0
        %v300 = vadd.f32 %v191, %v299
        %v301 = vpop.f32.mrb[0].mxu0
        %302 = vmatprep.mubr.f32.mxu0 0.0
        %303 = vmatmul.mubr.f32.gmra.mrb[0].mxu0 %v207
        %v304 = vpop.f32.mrb[0].mxu0
        %v305 = vadd.f32 %v191, %v304
        %v306 = vpop.f32.mrb[0].mxu0
        %307 = vmatprep.mubr.f32.mxu0 0.0
        %308 = vmatmul.mubr.f32.gmra.mrb[0].mxu0 %v210
        %v309 = vpop.f32.mrb[0].mxu0
        %v310 = vadd.f32 %v191, %v309
        %v311 = vpop.f32.mrb[0].mxu0
        %312 = vmatprep.mubr.f32.mxu0 0.0
        %313 = vmatmul.mubr.f32.gmra.mrb[0].mxu0 %v213
        %v314 = vpop.f32.mrb[0].mxu0
        %v315 = vadd.f32 %v191, %v314
        %v316 = vpop.f32.mrb[0].mxu0
        %317 = vmatprep.mubr.f32.mxu0 0.0
        %318 = vmatmul.mubr.f32.gmra.mrb[0].mxu0 %v216
        %v319 = vpop.f32.mrb[0].mxu0
        %v320 = vadd.f32 %v191, %v319
        %v321 = vpop.f32.mrb[0].mxu0
        %322 = vdwg.mxu0
        %323 = vst [vmem:[%s164] sm:$0xff] %v285
        %324 = vst [vmem:[%s164 + $0x8] sm:$0xff] %v290
        %325 = vst [vmem:[%s164 + $0x10] sm:$0xff] %v295
        %326 = vst [vmem:[%s164 + $0x18] sm:$0xff] %v300
        %327 = vst [vmem:[%s164 + $0x20] sm:$0xff] %v305
        %328 = vst [vmem:[%s164 + $0x28] sm:$0xff] %v310
        %329 = vst [vmem:[%s164 + $0x30] sm:$0xff] %v315
        %330 = vst [vmem:[%s164 + $0x38] sm:$0xff] %v320
        %s331 = sand.u32 %s93, 1
        %s332 = scalar_lea.sflag [#allocation3], %s331
        %s333 = sand.u32 %s93, 1
        %s334 = smul.addr %s333, 64
        %s335 = scalar_lea.vmem [#allocation2], %s334
        // Predicated region
        $region33: #{tpu_custom_call.1} parent=31 // pred_check
          %p336 = pneg %p103
        $region34: #{tpu_custom_call.1} parent=31 // pred_check_branch
          %338 = sbr.rel (%p336) target = $region36
        $region35: #{tpu_custom_call.1} parent=31 // pred_region
          %s339 = smul.u32 8, %s17
          %s341 = ssub.s32 1024, 1024
          %342 = vsyncadd %s332, %s341
          %s343 = smul.addr %s339, 128
          %s344 = scalar_lea.hbm %s3, %s343
          %s345 = sshll.u32 %s335, 4
          %s346 = int_to_ptr.vmem [resolvable:$true] %s345
          %351 = dma.vmem_to_hbm [thread:$0]  %s346, 1024, %s344, %s332, 128, 128, 8
        $region36: #{tpu_custom_call.1} parent=31 // pred_fallthru
          _
      $region32: #{tpu_custom_call.1} parent=5 // pred_fallthru
        _
      %p352 = scmp.le.s32.totalorder 2, %s12
      // Predicated region
      $region37: #{tpu_custom_call.1} parent=5 // pred_check
        %p353 = pneg %p352
      $region38: #{tpu_custom_call.1} parent=5 // pred_check_branch
        %355 = sbr.rel (%p353) target = $region40
      $region39: #{tpu_custom_call.1} parent=5 // pred_region
        %s356 = ssub.s32 %s12, 2
        // Predicated region
        $region41: #{tpu_custom_call.1} parent=39 // pred_check
          %p357 = pneg %p109
        $region42: #{tpu_custom_call.1} parent=39 // pred_check_branch
          %359 = sbr.rel (%p357) target = $region44
        $region43: #{tpu_custom_call.1} parent=39 // pred_region
          %s360 = sand.u32 %s94, 1
          %s361 = scalar_lea.sflag [#allocation3], %s360
          %s362 = sand.u32 %s94, 1
          %s363 = smul.addr %s362, 64
          %s364 = scalar_lea.vmem [#allocation2], %s363
          %365 = dma.done %s361, 1024
        $region44: #{tpu_custom_call.1} parent=39 // pred_fallthru
          _
      $region40: #{tpu_custom_call.1} parent=5 // pred_fallthru
        _
    $region6: #{tpu_custom_call.1} parent=1 // loop_footer
      %s16 = sadd.s32 1, %s12
    $region7: #{tpu_custom_call.1} parent=1 // loop_footer_branch
      %11 = sbr.rel target = $region3
    $region8: #{tpu_custom_call.1} parent=1 // loop_exit
      _
    %366 = vsyncpa [#allocation3], 1
    %s367 = scalar_lea.sflag [#allocation3], 1
    %368 = vsyncpa %s367, 1

</llo_original>
